<compile_context>
chip_gen: v5e
topology: v5e:2x2
jax: 0.10.0
libtpu: 0.0.40
codegen_flags: <defaults>
</compile_context>

<pallas_src>
import functools

import jax
import jax.numpy as jnp
from jax.experimental import pallas as pl
from jax.experimental.pallas import tpu as pltpu


def _round_up(x, m):
    return (x + m - 1) // m * m


def pfsp_encoder_kernel(x_ref,                  # (R, T)   processing times, R = IB*Jp stacked rows
                        m_ref,                  # (R, 1)   per-row machine count (repeated per job)
                        v_ref, c_ref,           # (1, Hp)  folded input projection / bias (f32)
                        w_hh_ref,               # (Hp, Hp) recurrent weight (mxu_dtype, zero-padded)
                        w2p_ref,                # (Hp, Op) Part II projection of p_i (mxu_dtype)
                        w_m2_ref, b_m2_ref,     # (1, Op)  folded machine-embedding path (f32)
                        w_conv_ref,             # (K, Op, Cp) conv taps (mxu_dtype)
                        b_conv_ref,             # (1, Cp)  conv bias (f32)
                        o_ref,                  # (R, Cp)  output block
                        *, J, Jp, K, pad, mxu_dtype):
    R, T = x_ref.shape
    Hp = w_hh_ref.shape[0]
    Op = w2p_ref.shape[1]
    Cp = o_ref.shape[1]
    IB = R // Jp                                         # instances stacked in this block

    x = x_ref[...]                                       # (R, T) f32
    w_hh = w_hh_ref[...]                                 # (Hp, Hp) mxu_dtype
    # Hoist broadcasts (JAX does not CSE broadcast_in_dim).
    vb = jnp.broadcast_to(v_ref[...], (R, Hp))
    cb = jnp.broadcast_to(c_ref[...], (R, Hp))

    # ---- Part I: tanh RNN over the machine-sequence axis ----
    # Input terms do not depend on h -> hoisted off the serial matmul->tanh chain.
    inps = [x[:, t:t + 1] * vb + cb for t in range(T)]   # T x (R, Hp) VPU broadcast-FMA, f32
    h = jnp.tanh(inps[0])                                # h_0 = 0 -> recurrent term vanishes at t=0
    for t in range(1, T):                                # T small, statically unrolled
        rec = jnp.dot(h.astype(mxu_dtype), w_hh, preferred_element_type=jnp.float32)
        h = jnp.tanh(inps[t] + rec)                      # f32 tanh (EUP), safe on v5e
    # TODO(synk): pltpu.matmul_push_rhs(w_hh) once + matmul_acc_lhs/matmul_pop per step to avoid
    #             re-pushing the weight every iteration of the serial chain.

    # ---- Part II: integrate per-instance machine-count scalar (folded path) ----
    bias2 = m_ref[...] * w_m2_ref[...] + b_m2_ref[...]   # (R,1)*(1,Op)+(1,Op) -> (R, Op), f32
    p_tilde = jnp.maximum(
        jnp.dot(h.astype(mxu_dtype), w2p_ref[...], preferred_element_type=jnp.float32) + bias2,
        0.0)

    # Local job index within each stacked instance (no div/mod: IB static copies of a (Jp,Op) iota).
    j_tile = jax.lax.broadcasted_iota(jnp.int32, (Jp, Op), 0)
    j_loc = j_tile if IB == 1 else jnp.concatenate([j_tile] * IB, axis=0)   # (R, Op)

    # Zero the padded job rows (the RNN bias leaks nonzero values into them) so the conv's zero
    # padding beyond each instance's last real job is exact.
    p_tilde = jnp.where(j_loc < J, p_tilde, 0.0)

    # ---- Part III: "same" 1-D conv over the job axis as K accumulating matmuls ----
    # Row-shifted taps of p_tilde; per-tap masks stop taps from reading across instance boundaries
    # (required because IB instances share the sublane axis inside one block).
    if pad > 0:
        zrow = jnp.zeros((pad, Op), jnp.float32)
        p_padded = jnp.concatenate([zrow, p_tilde, zrow], axis=0)           # (R + 2*pad, Op)
    else:
        p_padded = p_tilde

    acc = jnp.zeros((R, Cp), jnp.float32)
    for dk in range(K):                                   # K small, statically unrolled
        off = dk - pad
        tap = p_padded[dk:dk + R, :]
        if off < 0:
            tap = jnp.where(j_loc >= -off, tap, 0.0)      # don't read previous instance's jobs
        elif off > 0:
            tap = jnp.where(j_loc < Jp - off, tap, 0.0)   # don't read next instance's jobs
        acc = acc + jnp.dot(tap.astype(mxu_dtype), w_conv_ref[dk],
                            preferred_element_type=jnp.float32)
    o_ref[...] = acc + b_conv_ref[...]                    # lane-dense, unmasked full-width store


def _fold_and_pad(params, mxu_dtype, lane=128):
    """Fold the per-step input projection / machine path and zero-pad lane dims (exact)."""
    H = params["w_hh"].shape[0]
    O = params["w2p"].shape[1]
    K, _, C = params["w_conv"].shape
    Hp = _round_up(H, lane)
    Op = _round_up(O, lane)
    Cp = _round_up(C, lane)

    # Part I folds: e_t @ w_ih = x_t * (w_emb @ w_ih) + b_emb @ w_ih ; biases folded into c.
    v = params["w_emb"] @ params["w_ih"]                                     # (1, H)
    c = params["b_emb"] @ params["w_ih"] + params["b_ih"] + params["b_hh"]   # (1, H)
    v = jnp.pad(v, ((0, 0), (0, Hp - H)))
    c = jnp.pad(c, ((0, 0), (0, Hp - H)))
    w_hh = jnp.pad(params["w_hh"], ((0, Hp - H), (0, Hp - H))).astype(mxu_dtype)

    # Part II folds: m_emb @ w2m = m * (w_m @ w2m) + (b_m @ w2m + b2).
    w2p = jnp.pad(params["w2p"], ((0, Hp - H), (0, Op - O))).astype(mxu_dtype)
    w_m2 = jnp.pad(params["w_m"] @ params["w2m"], ((0, 0), (0, Op - O)))
    b_m2 = jnp.pad(params["b_m"] @ params["w2m"] + params["b2"], ((0, 0), (0, Op - O)))

    # Part III: conv taps kept as (K, Op, Cp) (no structural-zero slab).
    w_conv = jnp.pad(params["w_conv"], ((0, 0), (0, Op - O), (0, Cp - C))).astype(mxu_dtype)
    b_conv = jnp.pad(params["b_conv"], ((0, 0), (0, Cp - C)))

    return dict(v=v, c=c, w_hh=w_hh, w2p=w2p, w_m2=w_m2, b_m2=b_m2,
                w_conv=w_conv, b_conv=b_conv, dims=(Hp, Op, Cp))


@functools.partial(jax.jit, static_argnames=("mxu_dtype",))
def pfsp_encoder_batched(processing_times, num_machines, params, *, mxu_dtype=jnp.bfloat16):
    """Batched forward.

    processing_times: (B, J, T) or (B, J, T, 1); num_machines: (B,) per-instance scalar.
    Returns (B, J, conv_out_channels).
    """
    x = processing_times
    if x.ndim == 4:
        x = x[..., 0]                                     # (B, J, T)
    B, J, T = x.shape
    K, O, C = params["w_conv"].shape
    # PyTorch Conv1d with padding=(K-1)//2 only has symmetric 'same' semantics for odd K.
    assert K % 2 == 1, "conv_kernel_size must be odd for 'same' conv semantics"
    pad = (K - 1) // 2

    f = _fold_and_pad(params, mxu_dtype)
    Hp, Op, Cp = f["dims"]

    Jp = _round_up(J, 8)                                  # sublane-align the job axis
    IB = max(1, min(B, max(1, 128 // Jp)))                # instances per grid block (<=128 MXU rows)
    grid_b = -(-B // IB)                                  # ceil-div
    Bp = grid_b * IB
    R = IB * Jp                                           # rows per grid block

    # Stack instances along the sublane/job axis; pad instances are isolated by the in-kernel masks.
    x_rows = jnp.pad(x, ((0, Bp - B), (0, Jp - J), (0, 0))).reshape(Bp * Jp, T)
    m = jnp.asarray(num_machines, jnp.float32).reshape(B)
    m_rows = jnp.repeat(jnp.pad(m, (0, Bp - B)), Jp).reshape(Bp * Jp, 1)

    kern = functools.partial(pfsp_encoder_kernel, J=J, Jp=Jp, K=K, pad=pad, mxu_dtype=mxu_dtype)

    rows = lambda i: (i, 0)        # activation blocks advance with the grid
    fixed2 = lambda i: (0, 0)      # weights: constant index_map -> DMA'd once, VMEM-resident
    fixed3 = lambda i: (0, 0, 0)

    out = pl.pallas_call(
        kern,
        out_shape=jax.ShapeDtypeStruct((Bp * Jp, Cp), jnp.float32),
        grid=(grid_b,),
        in_specs=[
            pl.BlockSpec((R, T), rows),           # x rows
            pl.BlockSpec((R, 1), rows),           # per-row machine count
            pl.BlockSpec((1, Hp), fixed2),        # v
            pl.BlockSpec((1, Hp), fixed2),        # c
            pl.BlockSpec((Hp, Hp), fixed2),       # w_hh
            pl.BlockSpec((Hp, Op), fixed2),       # w2p
            pl.BlockSpec((1, Op), fixed2),        # w_m @ w2m
            pl.BlockSpec((1, Op), fixed2),        # b_m @ w2m + b2
            pl.BlockSpec((K, Op, Cp), fixed3),    # conv taps
            pl.BlockSpec((1, Cp), fixed2),        # conv bias
        ],
        out_specs=pl.BlockSpec((R, Cp), rows),
        compiler_params=pltpu.CompilerParams(
            dimension_semantics=("parallel",)),   # instance blocks shard across TCs (v7x)
    )(x_rows, m_rows, f["v"], f["c"], f["w_hh"], f["w2p"], f["w_m2"], f["b_m2"],
      f["w_conv"], f["b_conv"])

    return out.reshape(Bp, Jp, Cp)[:B, :J, :C]


def pfsp_encoder(instance_processing_times, num_machines_scalar, params, *,
                 mxu_dtype=jnp.bfloat16):
    """Module-equivalent single-instance forward: (J, T, 1) + scalar -> (J, conv_out_channels)."""
    x = jnp.asarray(instance_processing_times)[None]          # (1, J, T, 1)
    m = jnp.asarray(num_machines_scalar, jnp.float32).reshape(1)
    return pfsp_encoder_batched(x, m, params, mxu_dtype=mxu_dtype)[0]


def make_params(key, embedding_dim, hidden_dim, m_embedding_dim,
                output_dim, conv_out_channels, kernel_size):
    ks = jax.random.split(key, 13)
    init = lambda k, shape: 0.1 * jax.random.normal(k, shape, jnp.float32)
    return dict(
        w_emb=init(ks[0], (1, embedding_dim)),
        b_emb=init(ks[1], (1, embedding_dim)),
        w_ih=init(ks[2], (embedding_dim, hidden_dim)),
        b_ih=init(ks[3], (1, hidden_dim)),
        w_hh=init(ks[4], (hidden_dim, hidden_dim)),
        b_hh=init(ks[5], (1, hidden_dim)),
        w_m=init(ks[6], (1, m_embedding_dim)),
        b_m=init(ks[7], (1, m_embedding_dim)),
        w2p=init(ks[8], (hidden_dim, output_dim)),
        w2m=init(ks[9], (m_embedding_dim, output_dim)),
        b2=init(ks[10], (1, output_dim)),
        w_conv=init(ks[11], (kernel_size, output_dim, conv_out_channels)),
        b_conv=init(ks[12], (1, conv_out_channels)),
    )


def pfsp_encoder_reference(x_jt, m_scalar, p):
    """Pure-JAX reference (unfolded, unpadded, f32) used to validate the kernel."""
    J, T = x_jt.shape
    H = p["w_hh"].shape[0]
    h = jnp.zeros((J, H), jnp.float32)
    for t in range(T):
        e = x_jt[:, t:t + 1] * p["w_emb"] + p["b_emb"]
        h = jnp.tanh(e @ p["w_ih"] + p["b_ih"] + h @ p["w_hh"] + p["b_hh"])
    m_emb = m_scalar * p["w_m"] + p["b_m"]
    pt = jnp.maximum(h @ p["w2p"] + m_emb @ p["w2m"] + p["b2"], 0.0)
    K = p["w_conv"].shape[0]
    pad = (K - 1) // 2
    padded = jnp.pad(pt, ((pad, pad), (0, 0)))
    out = jnp.broadcast_to(p["b_conv"], (J, p["w_conv"].shape[2]))
    for dk in range(K):
        out = out + padded[dk:dk + J] @ p["w_conv"][dk]
    return out


if __name__ == "__main__":
    # Small PFSPNet configuration: 8 jobs, 5 machine steps per job sequence, 4 instances.
    part1_args = dict(scalar_input_dim=1, embedding_dim=32, hidden_dim=64, rnn_type="RNN")
    part2_args = dict(p_vector_dim=64, m_embedding_dim=16, output_dim=64)
    part3_args = dict(p_tilde_dim=64, conv_out_channels=128, conv_kernel_size=3)

    key = jax.random.PRNGKey(0)
    k_x, k_p = jax.random.split(key)

    B, J, T = 4, 8, 5
    # PyTorch input layout per instance: (num_jobs, num_machines_in_job_seq, scalar_input_dim=1)
    x_batch = jax.random.uniform(k_x, (B, J, T, 1), jnp.float32)
    m_batch = jnp.array([5.0, 4.0, 6.0, 3.0], jnp.float32)     # per-instance machine counts

    params = make_params(k_p,
                         embedding_dim=part1_args["embedding_dim"],
                         hidden_dim=part1_args["hidden_dim"],
                         m_embedding_dim=part2_args["m_embedding_dim"],
                         output_dim=part2_args["output_dim"],
                         conv_out_channels=part3_args["conv_out_channels"],
                         kernel_size=part3_args["conv_kernel_size"])
    C = part3_args["conv_out_channels"]

    # 1) Module-equivalent single-instance forward, exact f32 MXU path (tight tolerance).
    p_bar = pfsp_encoder(x_batch[0], m_batch[0], params, mxu_dtype=jnp.float32)
    p_bar = jax.block_until_ready(p_bar)
    ref0 = pfsp_encoder_reference(x_batch[0, ..., 0], m_batch[0], params)
    assert p_bar.shape == (J, C)
    assert jnp.allclose(p_bar, ref0, atol=2e-4, rtol=2e-4), "single-instance f32 kernel mismatch"

    # 2) Batched perf path: B instances in one pallas_call, bf16 MXU operands / f32 accumulation.
    p_bar_b = pfsp_encoder_batched(x_batch, m_batch, params)   # default mxu_dtype=bf16
    p_bar_b = jax.block_until_ready(p_bar_b)
    assert p_bar_b.shape == (B, J, C)
    for b in range(B):
        ref_b = pfsp_encoder_reference(x_batch[b, ..., 0], m_batch[b], params)
        assert jnp.allclose(p_bar_b[b], ref_b, atol=5e-2, rtol=5e-2), \
            f"batched bf16 kernel mismatch at instance {b}"

    print("KERNEL_OK")
</pallas_src>

<mosaic_0001>
module attributes {stable_mosaic.version = 11 : i64} {
  func.func @pfsp_encoder_kernel(%arg0: i32, %arg1: memref<8x5xf32, #tpu.memory_space<vmem>>, %arg2: memref<8x1xf32, #tpu.memory_space<vmem>>, %arg3: memref<1x128xf32, #tpu.memory_space<vmem>>, %arg4: memref<1x128xf32, #tpu.memory_space<vmem>>, %arg5: memref<128x128xf32, #tpu.memory_space<vmem>>, %arg6: memref<128x128xf32, #tpu.memory_space<vmem>>, %arg7: memref<1x128xf32, #tpu.memory_space<vmem>>, %arg8: memref<1x128xf32, #tpu.memory_space<vmem>>, %arg9: memref<3x128x128xf32, #tpu.memory_space<vmem>>, %arg10: memref<1x128xf32, #tpu.memory_space<vmem>>, %arg11: memref<8x128xf32, #tpu.memory_space<vmem>>) attributes {dimension_semantics = [#tpu.dimension_semantics<parallel>], iteration_bounds = array<i64: 1>, scalar_prefetch = 0 : i64, scratch_operands = 0 : i64, tpu.core_type = #tpu.core_type<tc>, window_params = [{transform_indices = @transform_0, window_bounds = array<i64: 8, 5>}, {transform_indices = @transform_1, window_bounds = array<i64: 8, 1>}, {pipeline_mode = #tpu.pipeline_mode<synchronous>, transform_indices = @transform_2, window_bounds = array<i64: 1, 128>}, {pipeline_mode = #tpu.pipeline_mode<synchronous>, transform_indices = @transform_3, window_bounds = array<i64: 1, 128>}, {pipeline_mode = #tpu.pipeline_mode<synchronous>, transform_indices = @transform_4, window_bounds = array<i64: 128, 128>}, {pipeline_mode = #tpu.pipeline_mode<synchronous>, transform_indices = @transform_5, window_bounds = array<i64: 128, 128>}, {pipeline_mode = #tpu.pipeline_mode<synchronous>, transform_indices = @transform_6, window_bounds = array<i64: 1, 128>}, {pipeline_mode = #tpu.pipeline_mode<synchronous>, transform_indices = @transform_7, window_bounds = array<i64: 1, 128>}, {pipeline_mode = #tpu.pipeline_mode<synchronous>, transform_indices = @transform_8, window_bounds = array<i64: 3, 128, 128>}, {pipeline_mode = #tpu.pipeline_mode<synchronous>, transform_indices = @transform_9, window_bounds = array<i64: 1, 128>}, {transform_indices = @transform_10, window_bounds = array<i64: 8, 128>}]} {
    %c0 = arith.constant 0 : index
    %c0_0 = arith.constant 0 : index
    %0 = vector.load %arg1[%c0, %c0_0] : memref<8x5xf32, #tpu.memory_space<vmem>>, vector<8x5xf32>
    %c0_1 = arith.constant 0 : index
    %c0_2 = arith.constant 0 : index
    %1 = vector.load %arg5[%c0_1, %c0_2] : memref<128x128xf32, #tpu.memory_space<vmem>>, vector<128x128xf32>
    %c0_3 = arith.constant 0 : index
    %c0_4 = arith.constant 0 : index
    %2 = vector.load %arg3[%c0_3, %c0_4] : memref<1x128xf32, #tpu.memory_space<vmem>>, vector<1x128xf32>
    %3 = vector.shape_cast %2 : vector<1x128xf32> to vector<1x128xf32>
    %4 = vector.broadcast %3 : vector<1x128xf32> to vector<8x128xf32>
    %c0_5 = arith.constant 0 : index
    %c0_6 = arith.constant 0 : index
    %5 = vector.load %arg4[%c0_5, %c0_6] : memref<1x128xf32, #tpu.memory_space<vmem>>, vector<1x128xf32>
    %6 = vector.shape_cast %5 : vector<1x128xf32> to vector<1x128xf32>
    %7 = vector.broadcast %6 : vector<1x128xf32> to vector<8x128xf32>
    %8 = vector.extract_strided_slice %0 {offsets = [0, 0], sizes = [8, 1], strides = [1, 1]} : vector<8x5xf32> to vector<8x1xf32>
    %9 = vector.broadcast %8 : vector<8x1xf32> to vector<8x128xf32>
    %10 = arith.mulf %9, %4 : vector<8x128xf32>
    %11 = arith.addf %10, %7 : vector<8x128xf32>
    %12 = vector.extract_strided_slice %0 {offsets = [0, 1], sizes = [8, 1], strides = [1, 1]} : vector<8x5xf32> to vector<8x1xf32>
    %13 = vector.broadcast %12 : vector<8x1xf32> to vector<8x128xf32>
    %14 = arith.mulf %13, %4 : vector<8x128xf32>
    %15 = arith.addf %14, %7 : vector<8x128xf32>
    %16 = vector.extract_strided_slice %0 {offsets = [0, 2], sizes = [8, 1], strides = [1, 1]} : vector<8x5xf32> to vector<8x1xf32>
    %17 = vector.broadcast %16 : vector<8x1xf32> to vector<8x128xf32>
    %18 = arith.mulf %17, %4 : vector<8x128xf32>
    %19 = arith.addf %18, %7 : vector<8x128xf32>
    %20 = vector.extract_strided_slice %0 {offsets = [0, 3], sizes = [8, 1], strides = [1, 1]} : vector<8x5xf32> to vector<8x1xf32>
    %21 = vector.broadcast %20 : vector<8x1xf32> to vector<8x128xf32>
    %22 = arith.mulf %21, %4 : vector<8x128xf32>
    %23 = arith.addf %22, %7 : vector<8x128xf32>
    %24 = vector.extract_strided_slice %0 {offsets = [0, 4], sizes = [8, 1], strides = [1, 1]} : vector<8x5xf32> to vector<8x1xf32>
    %25 = vector.broadcast %24 : vector<8x1xf32> to vector<8x128xf32>
    %26 = arith.mulf %25, %4 : vector<8x128xf32>
    %27 = arith.addf %26, %7 : vector<8x128xf32>
    %28 = math.tanh %11 : vector<8x128xf32>
    %cst = arith.constant dense<0.000000e+00> : vector<8x128xf32>
    %29 = tpu.matmul %28, %1, %cst {dimension_numbers = #tpu.dot_dimension_numbers<[1], [0], [0], [1], [0, 0, 1, 1], [], []>} : vector<8x128xf32>, vector<128x128xf32>, vector<8x128xf32> -> vector<8x128xf32>
    %30 = arith.addf %15, %29 : vector<8x128xf32>
    %31 = math.tanh %30 : vector<8x128xf32>
    %cst_7 = arith.constant dense<0.000000e+00> : vector<8x128xf32>
    %32 = tpu.matmul %31, %1, %cst_7 {dimension_numbers = #tpu.dot_dimension_numbers<[1], [0], [0], [1], [0, 0, 1, 1], [], []>} : vector<8x128xf32>, vector<128x128xf32>, vector<8x128xf32> -> vector<8x128xf32>
    %33 = arith.addf %19, %32 : vector<8x128xf32>
    %34 = math.tanh %33 : vector<8x128xf32>
    %cst_8 = arith.constant dense<0.000000e+00> : vector<8x128xf32>
    %35 = tpu.matmul %34, %1, %cst_8 {dimension_numbers = #tpu.dot_dimension_numbers<[1], [0], [0], [1], [0, 0, 1, 1], [], []>} : vector<8x128xf32>, vector<128x128xf32>, vector<8x128xf32> -> vector<8x128xf32>
    %36 = arith.addf %23, %35 : vector<8x128xf32>
    %37 = math.tanh %36 : vector<8x128xf32>
    %cst_9 = arith.constant dense<0.000000e+00> : vector<8x128xf32>
    %38 = tpu.matmul %37, %1, %cst_9 {dimension_numbers = #tpu.dot_dimension_numbers<[1], [0], [0], [1], [0, 0, 1, 1], [], []>} : vector<8x128xf32>, vector<128x128xf32>, vector<8x128xf32> -> vector<8x128xf32>
    %39 = arith.addf %27, %38 : vector<8x128xf32>
    %40 = math.tanh %39 : vector<8x128xf32>
    %c0_10 = arith.constant 0 : index
    %c0_11 = arith.constant 0 : index
    %41 = vector.load %arg2[%c0_10, %c0_11] : memref<8x1xf32, #tpu.memory_space<vmem>>, vector<8x1xf32>
    %c0_12 = arith.constant 0 : index
    %c0_13 = arith.constant 0 : index
    %42 = vector.load %arg7[%c0_12, %c0_13] : memref<1x128xf32, #tpu.memory_space<vmem>>, vector<1x128xf32>
    %43 = vector.broadcast %41 : vector<8x1xf32> to vector<8x128xf32>
    %44 = vector.broadcast %42 : vector<1x128xf32> to vector<8x128xf32>
    %45 = arith.mulf %43, %44 : vector<8x128xf32>
    %c0_14 = arith.constant 0 : index
    %c0_15 = arith.constant 0 : index
    %46 = vector.load %arg8[%c0_14, %c0_15] : memref<1x128xf32, #tpu.memory_space<vmem>>, vector<1x128xf32>
    %47 = vector.broadcast %46 : vector<1x128xf32> to vector<8x128xf32>
    %48 = arith.addf %45, %47 : vector<8x128xf32>
    %c0_16 = arith.constant 0 : index
    %c0_17 = arith.constant 0 : index
    %49 = vector.load %arg6[%c0_16, %c0_17] : memref<128x128xf32, #tpu.memory_space<vmem>>, vector<128x128xf32>
    %cst_18 = arith.constant dense<0.000000e+00> : vector<8x128xf32>
    %50 = tpu.matmul %40, %49, %cst_18 {dimension_numbers = #tpu.dot_dimension_numbers<[1], [0], [0], [1], [0, 0, 1, 1], [], []>} : vector<8x128xf32>, vector<128x128xf32>, vector<8x128xf32> -> vector<8x128xf32>
    %51 = arith.addf %50, %48 : vector<8x128xf32>
    %cst_19 = arith.constant 0.000000e+00 : f32
    %52 = vector.broadcast %cst_19 : f32 to vector<8x128xf32>
    %53 = arith.maximumf %51, %52 : vector<8x128xf32>
    %54 = tpu.iota {dimensions = array<i32: 0>} : vector<8x128xi32>
    %c8_i32 = arith.constant 8 : i32
    %55 = vector.broadcast %c8_i32 : i32 to vector<8x128xi32>
    %56 = arith.cmpi slt, %54, %55 : vector<8x128xi32>
    %cst_20 = arith.constant 0.000000e+00 : f32
    %57 = vector.broadcast %cst_20 : f32 to vector<8x128xf32>
    %58 = arith.select %56, %53, %57 : vector<8x128xi1>, vector<8x128xf32>
    %cst_21 = arith.constant 0.000000e+00 : f32
    %59 = vector.broadcast %cst_21 : f32 to vector<1x128xf32>
    %60 = tpu.concatenate %59, %58, %59 in 0 : vector<1x128xf32>, vector<8x128xf32>, vector<1x128xf32> -> vector<10x128xf32>
    %cst_22 = arith.constant 0.000000e+00 : f32
    %61 = vector.broadcast %cst_22 : f32 to vector<8x128xf32>
    %62 = vector.extract_strided_slice %60 {offsets = [0, 0], sizes = [8, 128], strides = [1, 1]} : vector<10x128xf32> to vector<8x128xf32>
    %c1_i32 = arith.constant 1 : i32
    %63 = vector.broadcast %c1_i32 : i32 to vector<8x128xi32>
    %64 = arith.cmpi sge, %54, %63 : vector<8x128xi32>
    %cst_23 = arith.constant 0.000000e+00 : f32
    %65 = vector.broadcast %cst_23 : f32 to vector<8x128xf32>
    %66 = arith.select %64, %62, %65 : vector<8x128xi1>, vector<8x128xf32>
    %c0_24 = arith.constant 0 : index
    %c0_25 = arith.constant 0 : index
    %c0_26 = arith.constant 0 : index
    %67 = vector.load %arg9[%c0_24, %c0_25, %c0_26] : memref<3x128x128xf32, #tpu.memory_space<vmem>>, vector<1x128x128xf32>
    %68 = vector.shape_cast %67 : vector<1x128x128xf32> to vector<128x128xf32>
    %cst_27 = arith.constant dense<0.000000e+00> : vector<8x128xf32>
    %69 = tpu.matmul %66, %68, %cst_27 {dimension_numbers = #tpu.dot_dimension_numbers<[1], [0], [0], [1], [0, 0, 1, 1], [], []>} : vector<8x128xf32>, vector<128x128xf32>, vector<8x128xf32> -> vector<8x128xf32>
    %70 = arith.addf %61, %69 : vector<8x128xf32>
    %71 = vector.extract_strided_slice %60 {offsets = [1, 0], sizes = [8, 128], strides = [1, 1]} : vector<10x128xf32> to vector<8x128xf32>
    %c1 = arith.constant 1 : index
    %c0_28 = arith.constant 0 : index
    %c0_29 = arith.constant 0 : index
    %72 = vector.load %arg9[%c1, %c0_28, %c0_29] : memref<3x128x128xf32, #tpu.memory_space<vmem>>, vector<1x128x128xf32>
    %73 = vector.shape_cast %72 : vector<1x128x128xf32> to vector<128x128xf32>
    %cst_30 = arith.constant dense<0.000000e+00> : vector<8x128xf32>
    %74 = tpu.matmul %71, %73, %cst_30 {dimension_numbers = #tpu.dot_dimension_numbers<[1], [0], [0], [1], [0, 0, 1, 1], [], []>} : vector<8x128xf32>, vector<128x128xf32>, vector<8x128xf32> -> vector<8x128xf32>
    %75 = arith.addf %70, %74 : vector<8x128xf32>
    %76 = vector.extract_strided_slice %60 {offsets = [2, 0], sizes = [8, 128], strides = [1, 1]} : vector<10x128xf32> to vector<8x128xf32>
    %c7_i32 = arith.constant 7 : i32
    %77 = vector.broadcast %c7_i32 : i32 to vector<8x128xi32>
    %78 = arith.cmpi slt, %54, %77 : vector<8x128xi32>
    %cst_31 = arith.constant 0.000000e+00 : f32
    %79 = vector.broadcast %cst_31 : f32 to vector<8x128xf32>
    %80 = arith.select %78, %76, %79 : vector<8x128xi1>, vector<8x128xf32>
    %c2 = arith.constant 2 : index
    %c0_32 = arith.constant 0 : index
    %c0_33 = arith.constant 0 : index
    %81 = vector.load %arg9[%c2, %c0_32, %c0_33] : memref<3x128x128xf32, #tpu.memory_space<vmem>>, vector<1x128x128xf32>
    %82 = vector.shape_cast %81 : vector<1x128x128xf32> to vector<128x128xf32>
    %cst_34 = arith.constant dense<0.000000e+00> : vector<8x128xf32>
    %83 = tpu.matmul %80, %82, %cst_34 {dimension_numbers = #tpu.dot_dimension_numbers<[1], [0], [0], [1], [0, 0, 1, 1], [], []>} : vector<8x128xf32>, vector<128x128xf32>, vector<8x128xf32> -> vector<8x128xf32>
    %84 = arith.addf %75, %83 : vector<8x128xf32>
    %c0_35 = arith.constant 0 : index
    %c0_36 = arith.constant 0 : index
    %85 = vector.load %arg10[%c0_35, %c0_36] : memref<1x128xf32, #tpu.memory_space<vmem>>, vector<1x128xf32>
    %86 = vector.broadcast %85 : vector<1x128xf32> to vector<8x128xf32>
    %87 = arith.addf %84, %86 : vector<8x128xf32>
    %c0_37 = arith.constant 0 : index
    %c0_38 = arith.constant 0 : index
    %88 = vector.load %arg11[%c0_37, %c0_38] : memref<8x128xf32, #tpu.memory_space<vmem>>, vector<8x128xf32>
    tpu.vector_store %arg11[%c0_37, %c0_38], %87 {strides = array<i32>} : memref<8x128xf32, #tpu.memory_space<vmem>>, vector<8x128xf32>,
    return
  }
  func.func @transform_0(%arg0: i32) -> (i32, i32) {
    %c0_i32 = arith.constant 0 : i32
    %c0_i32_0 = arith.constant 0 : i32
    return %arg0, %c0_i32 : i32, i32
  }
  func.func @transform_1(%arg0: i32) -> (i32, i32) {
    %c0_i32 = arith.constant 0 : i32
    %c0_i32_0 = arith.constant 0 : i32
    return %arg0, %c0_i32 : i32, i32
  }
  func.func @transform_2(%arg0: i32) -> (i32, i32) {
    %c0_i32 = arith.constant 0 : i32
    %c0_i32_0 = arith.constant 0 : i32
    %c0_i32_1 = arith.constant 0 : i32
    return %c0_i32, %c0_i32_0 : i32, i32
  }
  func.func @transform_3(%arg0: i32) -> (i32, i32) {
    %c0_i32 = arith.constant 0 : i32
    %c0_i32_0 = arith.constant 0 : i32
    %c0_i32_1 = arith.constant 0 : i32
    return %c0_i32, %c0_i32_0 : i32, i32
  }
  func.func @transform_4(%arg0: i32) -> (i32, i32) {
    %c0_i32 = arith.constant 0 : i32
    %c0_i32_0 = arith.constant 0 : i32
    %c0_i32_1 = arith.constant 0 : i32
    return %c0_i32, %c0_i32_0 : i32, i32
  }
  func.func @transform_5(%arg0: i32) -> (i32, i32) {
    %c0_i32 = arith.constant 0 : i32
    %c0_i32_0 = arith.constant 0 : i32
    %c0_i32_1 = arith.constant 0 : i32
    return %c0_i32, %c0_i32_0 : i32, i32
  }
  func.func @transform_6(%arg0: i32) -> (i32, i32) {
    %c0_i32 = arith.constant 0 : i32
    %c0_i32_0 = arith.constant 0 : i32
    %c0_i32_1 = arith.constant 0 : i32
    return %c0_i32, %c0_i32_0 : i32, i32
  }
  func.func @transform_7(%arg0: i32) -> (i32, i32) {
    %c0_i32 = arith.constant 0 : i32
    %c0_i32_0 = arith.constant 0 : i32
    %c0_i32_1 = arith.constant 0 : i32
    return %c0_i32, %c0_i32_0 : i32, i32
  }
  func.func @transform_8(%arg0: i32) -> (i32, i32, i32) {
    %c0_i32 = arith.constant 0 : i32
    %c0_i32_0 = arith.constant 0 : i32
    %c0_i32_1 = arith.constant 0 : i32
    %c0_i32_2 = arith.constant 0 : i32
    return %c0_i32, %c0_i32_0, %c0_i32_1 : i32, i32, i32
  }
  func.func @transform_9(%arg0: i32) -> (i32, i32) {
    %c0_i32 = arith.constant 0 : i32
    %c0_i32_0 = arith.constant 0 : i32
    %c0_i32_1 = arith.constant 0 : i32
    return %c0_i32, %c0_i32_0 : i32, i32
  }
  func.func @transform_10(%arg0: i32) -> (i32, i32) {
    %c0_i32 = arith.constant 0 : i32
    %c0_i32_0 = arith.constant 0 : i32
    return %arg0, %c0_i32 : i32, i32
  }
}

</mosaic_0001>

<llo_original>
// kernel: pfsp_encoder_batched.1
$region0: #{pfsp_encoder_batched.1}
  #allocation0 [shape = 'u32[]', space=smem, size = 0x4, offset = 0x4, fixed_abs, tag = 'smem constant byte address 0x4 - core index']
  #allocation1 [shape = 'u32[72,128]{1,0:T(1,128)}', space=vmem, size = 0x9000, scoped, tag = 'internal scratch']
  %s0 = inlined_call_operand.vmem [shape: f32[8,5], index: 0, kind: input, shape index: {}]
  %s1 = inlined_call_operand.vmem [shape: f32[8,1], index: 1, kind: input, shape index: {}]
  %s2 = inlined_call_operand.vmem [shape: f32[1,128], index: 2, kind: input, shape index: {}]
  %s3 = inlined_call_operand.vmem [shape: f32[1,128], index: 3, kind: input, shape index: {}]
  %s4 = inlined_call_operand.vmem [shape: f32[128,128], index: 4, kind: input, shape index: {}]
  %s5 = inlined_call_operand.vmem [shape: f32[128,128], index: 5, kind: input, shape index: {}]
  %s6 = inlined_call_operand.vmem [shape: f32[1,128], index: 6, kind: input, shape index: {}]
  %s7 = inlined_call_operand.vmem [shape: f32[1,128], index: 7, kind: input, shape index: {}]
  %s8 = inlined_call_operand.vmem [shape: f32[3,128,128], index: 8, kind: input, shape index: {}]
  %s9 = inlined_call_operand.vmem [shape: f32[1,128], index: 9, kind: input, shape index: {}]
  %s10 = inlined_call_operand.hbm [shape: f32[8,128], index: 10, kind: output, shape index: {}]
  %s11 = sld [smem:[#allocation0]]
  $region50: #{pfsp_encoder_batched.1} parent=0
    _
  %s13 = ssub.s32 1, %s11
  %s14 = scalar_select 0, %s13, %s11
  $region1: #{pfsp_encoder_batched.1} parent=0
    #allocation2 [shape = 'u8[4096]{0}', space=vmem, size = 0x1000, scoped, tag = 'output window, operand 0, single buffered']
    #allocation3 [shape = 's32[1]{0}', space=sflag, size = 0x4, scoped, tag = 'scoped memory for pfsp_encoder_batched.1']
    %15 = vsyncpa [#allocation3], 0
    // Predicated region
    $region2: #{pfsp_encoder_batched.1} parent=1 // pred_check
      _
    $region3: #{pfsp_encoder_batched.1} parent=1 // pred_check_branch
      %17 = sbr.rel (0) target = $region5
    $region4: #{pfsp_encoder_batched.1} parent=1 // pred_region
      _
    $region5: #{pfsp_encoder_batched.1} parent=1 // pred_fallthru
      _
    // Predicated region
    $region6: #{pfsp_encoder_batched.1} parent=1 // pred_check
      _
    $region7: #{pfsp_encoder_batched.1} parent=1 // pred_check_branch
      %19 = sbr.rel (0) target = $region9
    $region8: #{pfsp_encoder_batched.1} parent=1 // pred_region
      _
    $region9: #{pfsp_encoder_batched.1} parent=1 // pred_fallthru
      _
    // Predicated region
    $region10: #{pfsp_encoder_batched.1} parent=1 // pred_check
      _
    $region11: #{pfsp_encoder_batched.1} parent=1 // pred_check_branch
      %21 = sbr.rel (0) target = $region13
    $region12: #{pfsp_encoder_batched.1} parent=1 // pred_region
      _
    $region13: #{pfsp_encoder_batched.1} parent=1 // pred_fallthru
      _
    // Predicated region
    $region14: #{pfsp_encoder_batched.1} parent=1 // pred_check
      _
    $region15: #{pfsp_encoder_batched.1} parent=1 // pred_check_branch
      %23 = sbr.rel (0) target = $region17
    $region16: #{pfsp_encoder_batched.1} parent=1 // pred_region
      _
    $region17: #{pfsp_encoder_batched.1} parent=1 // pred_fallthru
      _
    // Predicated region
    $region18: #{pfsp_encoder_batched.1} parent=1 // pred_check
      _
    $region19: #{pfsp_encoder_batched.1} parent=1 // pred_check_branch
      %25 = sbr.rel (0) target = $region21
    $region20: #{pfsp_encoder_batched.1} parent=1 // pred_region
      _
    $region21: #{pfsp_encoder_batched.1} parent=1 // pred_fallthru
      _
    // Predicated region
    $region22: #{pfsp_encoder_batched.1} parent=1 // pred_check
      _
    $region23: #{pfsp_encoder_batched.1} parent=1 // pred_check_branch
      %27 = sbr.rel (0) target = $region25
    $region24: #{pfsp_encoder_batched.1} parent=1 // pred_region
      _
    $region25: #{pfsp_encoder_batched.1} parent=1 // pred_fallthru
      _
    // Predicated region
    $region26: #{pfsp_encoder_batched.1} parent=1 // pred_check
      _
    $region27: #{pfsp_encoder_batched.1} parent=1 // pred_check_branch
      %29 = sbr.rel (0) target = $region29
    $region28: #{pfsp_encoder_batched.1} parent=1 // pred_region
      _
    $region29: #{pfsp_encoder_batched.1} parent=1 // pred_fallthru
      _
    // Predicated region
    $region30: #{pfsp_encoder_batched.1} parent=1 // pred_check
      _
    $region31: #{pfsp_encoder_batched.1} parent=1 // pred_check_branch
      %31 = sbr.rel (0) target = $region33
    $region32: #{pfsp_encoder_batched.1} parent=1 // pred_region
      _
    $region33: #{pfsp_encoder_batched.1} parent=1 // pred_fallthru
      _
    // Predicated region
    $region34: #{pfsp_encoder_batched.1} parent=1 // pred_check
      _
    $region35: #{pfsp_encoder_batched.1} parent=1 // pred_check_branch
      %33 = sbr.rel (0) target = $region37
    $region36: #{pfsp_encoder_batched.1} parent=1 // pred_region
      _
    $region37: #{pfsp_encoder_batched.1} parent=1 // pred_fallthru
      _
    // Predicated region
    $region38: #{pfsp_encoder_batched.1} parent=1 // pred_check
      _
    $region39: #{pfsp_encoder_batched.1} parent=1 // pred_check_branch
      %35 = sbr.rel (0) target = $region41
    $region40: #{pfsp_encoder_batched.1} parent=1 // pred_region
      _
    $region41: #{pfsp_encoder_batched.1} parent=1 // pred_fallthru
      _
    %v36 = vld [vmem:[%s0] sm:$0xff]
    %v37 = vld [vmem:[%s4] sm:$0xff]
    %v38 = vld [vmem:[%s4 + $0x8] sm:$0xff]
    %v39 = vld [vmem:[%s4 + $0x10] sm:$0xff]
    %v40 = vld [vmem:[%s4 + $0x18] sm:$0xff]
    %v41 = vld [vmem:[%s4 + $0x20] sm:$0xff]
    %v42 = vld [vmem:[%s4 + $0x28] sm:$0xff]
    %v43 = vld [vmem:[%s4 + $0x30] sm:$0xff]
    %v44 = vld [vmem:[%s4 + $0x38] sm:$0xff]
    %v45 = vld [vmem:[%s4 + $0x40] sm:$0xff]
    %v46 = vld [vmem:[%s4 + $0x48] sm:$0xff]
    %v47 = vld [vmem:[%s4 + $0x50] sm:$0xff]
    %v48 = vld [vmem:[%s4 + $0x58] sm:$0xff]
    %v49 = vld [vmem:[%s4 + $0x60] sm:$0xff]
    %v50 = vld [vmem:[%s4 + $0x68] sm:$0xff]
    %v51 = vld [vmem:[%s4 + $0x70] sm:$0xff]
    %v52 = vld [vmem:[%s4 + $0x78] sm:$0xff]
    %v53 = vld [vmem:[%s2] sm:$0x1]
    %v55 = vperm.slane %v53, 0
    %v57 = vld [vmem:[%s3] sm:$0x1]
    %v59 = vperm.slane %v57, 0
    %62 = vset.pattern.permute.xlu0 0
    %63 = vperm.xlu0 %62, %v36
    %v64 = vpop.permute.xlu0 %63
    %v66 = vmul.f32 %v64, %v55
    %v67 = vadd.f32 %v66, %v59
    %68 = vset.pattern.permute.xlu0 1
    %69 = vperm.xlu0 %68, %v36
    %v70 = vpop.permute.xlu0 %69
    %v72 = vmul.f32 %v70, %v55
    %v73 = vadd.f32 %v72, %v59
    %74 = vset.pattern.permute.xlu0 2
    %75 = vperm.xlu0 %74, %v36
    %v76 = vpop.permute.xlu0 %75
    %v78 = vmul.f32 %v76, %v55
    %v79 = vadd.f32 %v78, %v59
    %80 = vset.pattern.permute.xlu0 3
    %81 = vperm.xlu0 %80, %v36
    %v82 = vpop.permute.xlu0 %81
    %v84 = vmul.f32 %v82, %v55
    %v85 = vadd.f32 %v84, %v59
    %86 = vset.pattern.permute.xlu0 4
    %87 = vperm.xlu0 %86, %v36
    %v88 = vpop.permute.xlu0 %87
    %v90 = vmul.f32 %v88, %v55
    %v91 = vadd.f32 %v90, %v59
    %v92 = vtanh.pop %v67
    %93 = vmatpush.msra.mxu0 %v52
    %94 = vmatpush.msra.mxu0 %v51
    %95 = vmatpush.msra.mxu0 %v50
    %96 = vmatpush.msra.mxu0 %v49
    %97 = vmatpush.msra.mxu0 %v48
    %98 = vmatpush.msra.mxu0 %v47
    %99 = vmatpush.msra.mxu0 %v46
    %100 = vmatpush.msra.mxu0 %v45
    %101 = vmatpush.msra.mxu0 %v44
    %102 = vmatpush.msra.mxu0 %v43
    %103 = vmatpush.msra.mxu0 %v42
    %104 = vmatpush.msra.mxu0 %v41
    %105 = vmatpush.msra.mxu0 %v40
    %106 = vmatpush.msra.mxu0 %v39
    %107 = vmatpush.msra.mxu0 %v38
    %108 = vmatpush.msra.mxu0 %v37
    %109 = vmatmul.f32.gmra.mxu0 %v92
    %v110 = vpop.f32.mrf.mxu0
    %v111 = vadd.f32 0.0, %v110
    %112 = vdwg.mxu0
    %v113 = vadd.f32 %v73, %v111
    %v114 = vtanh.pop %v113
    %115 = vmatpush.msra.mxu0 %v52
    %116 = vmatpush.msra.mxu0 %v51
    %117 = vmatpush.msra.mxu0 %v50
    %118 = vmatpush.msra.mxu0 %v49
    %119 = vmatpush.msra.mxu0 %v48
    %120 = vmatpush.msra.mxu0 %v47
    %121 = vmatpush.msra.mxu0 %v46
    %122 = vmatpush.msra.mxu0 %v45
    %123 = vmatpush.msra.mxu0 %v44
    %124 = vmatpush.msra.mxu0 %v43
    %125 = vmatpush.msra.mxu0 %v42
    %126 = vmatpush.msra.mxu0 %v41
    %127 = vmatpush.msra.mxu0 %v40
    %128 = vmatpush.msra.mxu0 %v39
    %129 = vmatpush.msra.mxu0 %v38
    %130 = vmatpush.msra.mxu0 %v37
    %131 = vmatmul.f32.gmra.mxu0 %v114
    %v132 = vpop.f32.mrf.mxu0
    %v133 = vadd.f32 0.0, %v132
    %134 = vdwg.mxu0
    %v135 = vadd.f32 %v79, %v133
    %v136 = vtanh.pop %v135
    %137 = vmatpush.msra.mxu0 %v52
    %138 = vmatpush.msra.mxu0 %v51
    %139 = vmatpush.msra.mxu0 %v50
    %140 = vmatpush.msra.mxu0 %v49
    %141 = vmatpush.msra.mxu0 %v48
    %142 = vmatpush.msra.mxu0 %v47
    %143 = vmatpush.msra.mxu0 %v46
    %144 = vmatpush.msra.mxu0 %v45
    %145 = vmatpush.msra.mxu0 %v44
    %146 = vmatpush.msra.mxu0 %v43
    %147 = vmatpush.msra.mxu0 %v42
    %148 = vmatpush.msra.mxu0 %v41
    %149 = vmatpush.msra.mxu0 %v40
    %150 = vmatpush.msra.mxu0 %v39
    %151 = vmatpush.msra.mxu0 %v38
    %152 = vmatpush.msra.mxu0 %v37
    %153 = vmatmul.f32.gmra.mxu0 %v136
    %v154 = vpop.f32.mrf.mxu0
    %v155 = vadd.f32 0.0, %v154
    %156 = vdwg.mxu0
    %v157 = vadd.f32 %v85, %v155
    %v158 = vtanh.pop %v157
    %159 = vmatpush.msra.mxu0 %v52
    %160 = vmatpush.msra.mxu0 %v51
    %161 = vmatpush.msra.mxu0 %v50
    %162 = vmatpush.msra.mxu0 %v49
    %163 = vmatpush.msra.mxu0 %v48
    %164 = vmatpush.msra.mxu0 %v47
    %165 = vmatpush.msra.mxu0 %v46
    %166 = vmatpush.msra.mxu0 %v45
    %167 = vmatpush.msra.mxu0 %v44
    %168 = vmatpush.msra.mxu0 %v43
    %169 = vmatpush.msra.mxu0 %v42
    %170 = vmatpush.msra.mxu0 %v41
    %171 = vmatpush.msra.mxu0 %v40
    %172 = vmatpush.msra.mxu0 %v39
    %173 = vmatpush.msra.mxu0 %v38
    %174 = vmatpush.msra.mxu0 %v37
    %175 = vmatmul.f32.gmra.mxu0 %v158
    %v176 = vpop.f32.mrf.mxu0
    %v177 = vadd.f32 0.0, %v176
    %178 = vdwg.mxu0
    %v179 = vadd.f32 %v91, %v177
    %v180 = vtanh.pop %v179
    %v181 = vld [vmem:[%s1] sm:$0xff]
    %v182 = vld [vmem:[%s6] sm:$0x1]
    %184 = vset.pattern.permute.xlu0 0
    %185 = vperm.xlu0 %184, %v181
    %v186 = vpop.permute.xlu0 %185
    %v189 = vperm.slane %v182, 0
    %v191 = vmul.f32 %v186, %v189
    %v192 = vld [vmem:[%s7] sm:$0x1]
    %v194 = vperm.slane %v192, 0
    %v196 = vadd.f32 %v191, %v194
    %v197 = vld [vmem:[%s5] sm:$0xff]
    %v198 = vld [vmem:[%s5 + $0x8] sm:$0xff]
    %v199 = vld [vmem:[%s5 + $0x10] sm:$0xff]
    %v200 = vld [vmem:[%s5 + $0x18] sm:$0xff]
    %v201 = vld [vmem:[%s5 + $0x20] sm:$0xff]
    %v202 = vld [vmem:[%s5 + $0x28] sm:$0xff]
    %v203 = vld [vmem:[%s5 + $0x30] sm:$0xff]
    %v204 = vld [vmem:[%s5 + $0x38] sm:$0xff]
    %v205 = vld [vmem:[%s5 + $0x40] sm:$0xff]
    %v206 = vld [vmem:[%s5 + $0x48] sm:$0xff]
    %v207 = vld [vmem:[%s5 + $0x50] sm:$0xff]
    %v208 = vld [vmem:[%s5 + $0x58] sm:$0xff]
    %v209 = vld [vmem:[%s5 + $0x60] sm:$0xff]
    %v210 = vld [vmem:[%s5 + $0x68] sm:$0xff]
    %v211 = vld [vmem:[%s5 + $0x70] sm:$0xff]
    %v212 = vld [vmem:[%s5 + $0x78] sm:$0xff]
    %213 = vmatpush.msra.mxu0 %v212
    %214 = vmatpush.msra.mxu0 %v211
    %215 = vmatpush.msra.mxu0 %v210
    %216 = vmatpush.msra.mxu0 %v209
    %217 = vmatpush.msra.mxu0 %v208
    %218 = vmatpush.msra.mxu0 %v207
    %219 = vmatpush.msra.mxu0 %v206
    %220 = vmatpush.msra.mxu0 %v205
    %221 = vmatpush.msra.mxu0 %v204
    %222 = vmatpush.msra.mxu0 %v203
    %223 = vmatpush.msra.mxu0 %v202
    %224 = vmatpush.msra.mxu0 %v201
    %225 = vmatpush.msra.mxu0 %v200
    %226 = vmatpush.msra.mxu0 %v199
    %227 = vmatpush.msra.mxu0 %v198
    %228 = vmatpush.msra.mxu0 %v197
    %229 = vmatmul.f32.gmra.mxu0 %v180
    %v230 = vpop.f32.mrf.mxu0
    %v231 = vadd.f32 %v196, %v230
    %232 = vdwg.mxu0
    %v233 = vmax.f32 %v231, 0.0
    %v234 = vlaneseq
    %v235 = vshrl.u32 %v234, 7
    %vm236 = vcmp.lt.s32.totalorder %v235, 8
    %v237 = vsel %vm236, %v233, 0.0
    %v239 = vrot.slane %v237, 7
    %vm241 = vcmask 1040384
    %v242 = vsel %vm241, 0.0, %v239
    %v243 = vsel %vm241, %v239, 0.0
    %vm244 = vcmp.ge.s32.totalorder %v235, 1
    %v245 = vsel %vm244, %v242, 0.0
    %v246 = vld [vmem:[%s8] sm:$0xff]
    %v247 = vld [vmem:[%s8 + $0x8] sm:$0xff]
    %v248 = vld [vmem:[%s8 + $0x10] sm:$0xff]
    %v249 = vld [vmem:[%s8 + $0x18] sm:$0xff]
    %v250 = vld [vmem:[%s8 + $0x20] sm:$0xff]
    %v251 = vld [vmem:[%s8 + $0x28] sm:$0xff]
    %v252 = vld [vmem:[%s8 + $0x30] sm:$0xff]
    %v253 = vld [vmem:[%s8 + $0x38] sm:$0xff]
    %v254 = vld [vmem:[%s8 + $0x40] sm:$0xff]
    %v255 = vld [vmem:[%s8 + $0x48] sm:$0xff]
    %v256 = vld [vmem:[%s8 + $0x50] sm:$0xff]
    %v257 = vld [vmem:[%s8 + $0x58] sm:$0xff]
    %v258 = vld [vmem:[%s8 + $0x60] sm:$0xff]
    %v259 = vld [vmem:[%s8 + $0x68] sm:$0xff]
    %v260 = vld [vmem:[%s8 + $0x70] sm:$0xff]
    %v261 = vld [vmem:[%s8 + $0x78] sm:$0xff]
    %s262 = scalar_lea.vmem %s8, 128
    %v263 = vld [vmem:[%s262] sm:$0xff]
    %v264 = vld [vmem:[%s262 + $0x8] sm:$0xff]
    %v265 = vld [vmem:[%s262 + $0x10] sm:$0xff]
    %v266 = vld [vmem:[%s262 + $0x18] sm:$0xff]
    %v267 = vld [vmem:[%s262 + $0x20] sm:$0xff]
    %v268 = vld [vmem:[%s262 + $0x28] sm:$0xff]
    %v269 = vld [vmem:[%s262 + $0x30] sm:$0xff]
    %v270 = vld [vmem:[%s262 + $0x38] sm:$0xff]
    %v271 = vld [vmem:[%s262 + $0x40] sm:$0xff]
    %v272 = vld [vmem:[%s262 + $0x48] sm:$0xff]
    %v273 = vld [vmem:[%s262 + $0x50] sm:$0xff]
    %v274 = vld [vmem:[%s262 + $0x58] sm:$0xff]
    %v275 = vld [vmem:[%s262 + $0x60] sm:$0xff]
    %v276 = vld [vmem:[%s262 + $0x68] sm:$0xff]
    %v277 = vld [vmem:[%s262 + $0x70] sm:$0xff]
    %v278 = vld [vmem:[%s262 + $0x78] sm:$0xff]
    %vm281 = vcmask 1046528
    %v282 = vrot.slane %v242, 1
    %v283 = vrot.slane %v243, 1
    %v284 = vsel %vm281, %v282, %v283
    %286 = vmatpush.msra.mxu0 %v278
    %287 = vmatpush.msra.mxu0 %v277
    %288 = vmatpush.msra.mxu0 %v276
    %289 = vmatpush.msra.mxu0 %v275
    %290 = vmatpush.msra.mxu0 %v274
    %291 = vmatpush.msra.mxu0 %v273
    %292 = vmatpush.msra.mxu0 %v272
    %293 = vmatpush.msra.mxu0 %v271
    %294 = vmatpush.msra.mxu0 %v270
    %295 = vmatpush.msra.mxu0 %v269
    %296 = vmatpush.msra.mxu0 %v268
    %297 = vmatpush.msra.mxu0 %v267
    %298 = vmatpush.msra.mxu0 %v266
    %299 = vmatpush.msra.mxu0 %v265
    %300 = vmatpush.msra.mxu0 %v264
    %301 = vmatpush.msra.mxu0 %v263
    %302 = vmatmul.f32.gmra.mxu0 %v284
    %v303 = vpop.f32.mrf.mxu0
    %v304 = vadd.f32 0.0, %v303
    %305 = vdwg.mxu0
    %306 = vmatpush.msra.mxu0 %v261
    %307 = vmatpush.msra.mxu0 %v260
    %308 = vmatpush.msra.mxu0 %v259
    %309 = vmatpush.msra.mxu0 %v258
    %310 = vmatpush.msra.mxu0 %v257
    %311 = vmatpush.msra.mxu0 %v256
    %312 = vmatpush.msra.mxu0 %v255
    %313 = vmatpush.msra.mxu0 %v254
    %314 = vmatpush.msra.mxu0 %v253
    %315 = vmatpush.msra.mxu0 %v252
    %316 = vmatpush.msra.mxu0 %v251
    %317 = vmatpush.msra.mxu0 %v250
    %318 = vmatpush.msra.mxu0 %v249
    %319 = vmatpush.msra.mxu0 %v248
    %320 = vmatpush.msra.mxu0 %v247
    %321 = vmatpush.msra.mxu0 %v246
    %322 = vmatmul.f32.gmra.mxu0 %v245
    %v323 = vpop.f32.mrf.mxu0
    %v324 = vadd.f32 %v304, %v323
    %325 = vdwg.mxu0
    %vm326 = vcmp.lt.s32.totalorder %v235, 7
    %vm327 = vcmask 1045504
    %v328 = vrot.slane %v242, 2
    %v329 = vrot.slane %v243, 2
    %v330 = vsel %vm327, %v328, %v329
    %v332 = vsel %vm326, %v330, 0.0
    %s333 = scalar_lea.vmem %s8, 256
    %v334 = vld [vmem:[%s333] sm:$0xff]
    %v335 = vld [vmem:[%s333 + $0x8] sm:$0xff]
    %v336 = vld [vmem:[%s333 + $0x10] sm:$0xff]
    %v337 = vld [vmem:[%s333 + $0x18] sm:$0xff]
    %v338 = vld [vmem:[%s333 + $0x20] sm:$0xff]
    %v339 = vld [vmem:[%s333 + $0x28] sm:$0xff]
    %v340 = vld [vmem:[%s333 + $0x30] sm:$0xff]
    %v341 = vld [vmem:[%s333 + $0x38] sm:$0xff]
    %v342 = vld [vmem:[%s333 + $0x40] sm:$0xff]
    %v343 = vld [vmem:[%s333 + $0x48] sm:$0xff]
    %v344 = vld [vmem:[%s333 + $0x50] sm:$0xff]
    %v345 = vld [vmem:[%s333 + $0x58] sm:$0xff]
    %v346 = vld [vmem:[%s333 + $0x60] sm:$0xff]
    %v347 = vld [vmem:[%s333 + $0x68] sm:$0xff]
    %v348 = vld [vmem:[%s333 + $0x70] sm:$0xff]
    %v349 = vld [vmem:[%s333 + $0x78] sm:$0xff]
    %350 = vmatpush.msra.mxu0 %v349
    %351 = vmatpush.msra.mxu0 %v348
    %352 = vmatpush.msra.mxu0 %v347
    %353 = vmatpush.msra.mxu0 %v346
    %354 = vmatpush.msra.mxu0 %v345
    %355 = vmatpush.msra.mxu0 %v344
    %356 = vmatpush.msra.mxu0 %v343
    %357 = vmatpush.msra.mxu0 %v342
    %358 = vmatpush.msra.mxu0 %v341
    %359 = vmatpush.msra.mxu0 %v340
    %360 = vmatpush.msra.mxu0 %v339
    %361 = vmatpush.msra.mxu0 %v338
    %362 = vmatpush.msra.mxu0 %v337
    %363 = vmatpush.msra.mxu0 %v336
    %364 = vmatpush.msra.mxu0 %v335
    %365 = vmatpush.msra.mxu0 %v334
    %366 = vmatmul.f32.gmra.mxu0 %v332
    %v367 = vpop.f32.mrf.mxu0
    %v368 = vadd.f32 0.0, %v367
    %369 = vdwg.mxu0
    %v370 = vadd.f32 %v324, %v368
    %v371 = vld [vmem:[%s9] sm:$0x1]
    %v373 = vperm.slane %v371, 0
    %v375 = vadd.f32 %v370, %v373
    %376 = vst [vmem:[#allocation2] sm:$0xff] %v375
    // Predicated region
    $region42: #{pfsp_encoder_batched.1} parent=1 // pred_check
      _
    $region43: #{pfsp_encoder_batched.1} parent=1 // pred_check_branch
      %378 = sbr.rel (0) target = $region45
    $region44: #{pfsp_encoder_batched.1} parent=1 // pred_region
      %380 = vsyncadd [#allocation3], 0
      %s382 = sshll.u32 [#allocation2], 4
      %s383 = int_to_ptr.vmem [resolvable:$true] %s382
      %s384 = sshll.u32 %s10, 4
      %s385 = int_to_ptr.hbm [resolvable:$true] %s384
      %387 = dma.vmem_to_hbm [thread:$0]  %s383, 128, %s385, [#allocation3]
    $region45: #{pfsp_encoder_batched.1} parent=1 // pred_fallthru
      _
    // Predicated region
    $region46: #{pfsp_encoder_batched.1} parent=1 // pred_check
      _
    $region47: #{pfsp_encoder_batched.1} parent=1 // pred_check_branch
      %389 = sbr.rel (0) target = $region49
    $region48: #{pfsp_encoder_batched.1} parent=1 // pred_region
      %391 = dma.done [#allocation3], 128
    $region49: #{pfsp_encoder_batched.1} parent=1 // pred_fallthru
      _
    %392 = vsyncpa [#allocation3], 1

</llo_original>
